<compile_context>
chip_gen: v7x
topology: tpu7x:2x2x1
jax: 0.10.0
libtpu: 0.0.40
codegen_flags: <defaults>
</compile_context>

<pallas_src>
import functools
import math

import jax
import jax.numpy as jnp
from jax.experimental import pallas as pl
from jax.experimental.pallas import tpu as pltpu


def _shift_flat(x, s):
    """y[..., p] = x[..., (p + s) % n]; wrapped positions are masked by the caller."""
    n = x.shape[-1]
    k = s % n
    if k == 0:
        return x
    return jnp.concatenate([x[..., k:], x[..., :k]], axis=-1)


def _ghost_kernel(x_ref, w1_ref, s1_ref, b1_ref, w1e_ref, s1e_ref, b1e_ref,
                  w2_ref, s2_ref, b2_ref, mask_ref, o_ref, *,
                  H, W, cmid, cnew, cout, mult, K):
    HW = H * W
    cin = x_ref.shape[0]
    x = x_ref[...].astype(jnp.float32)                       # (Cin, HW)

    def primary(w_ref, s_ref, b_ref, cch):
        # 1x1 conv over a handful of channels: unrolled VPU multiply-add + fused BN/ReLU.
        w = w_ref[...].astype(jnp.float32)                   # (cch, Cin)
        acc = jnp.zeros((cch, HW), jnp.float32)
        for ci in range(cin):
            acc = acc + w[:, ci:ci + 1] * x[ci:ci + 1, :]
        return jnp.maximum(acc * s_ref[...] + b_ref[...], 0.0)

    # Channel-expanded primary output (row o corresponds to x1[o // mult]) feeds the
    # depthwise taps; when mult == 1 it is exactly x1, so compute it only once.
    x1e = primary(w1e_ref, s1e_ref, b1e_ref, cnew)           # (Cnew, HW)
    x1 = x1e if mult == 1 else primary(w1_ref, s1_ref, b1_ref, cmid)

    # Depthwise KxK on the flattened spatial axis: neighbor (h+di, w+dj) is a lane
    # shift of di*W + dj; out-of-image taps are zeroed by a precomputed mask.
    pad = K // 2
    w2 = w2_ref[...].astype(jnp.float32)                     # (Cnew, K*K)
    masks = mask_ref[...]                                    # (K*K, HW)
    acc2 = jnp.zeros((cnew, HW), jnp.float32)
    for di in range(-pad, pad + 1):
        for dj in range(-pad, pad + 1):
            t = (di + pad) * K + (dj + pad)
            shifted = _shift_flat(x1e, di * W + dj) * masks[t:t + 1, :]
            acc2 = acc2 + w2[:, t:t + 1] * shifted
    x2 = jnp.maximum(acc2 * s2_ref[...] + b2_ref[...], 0.0)

    # Fused concat + [:out_channels] slice.
    o_ref[0:cmid, :] = x1.astype(o_ref.dtype)
    if cout > cmid:
        o_ref[cmid:cout, :] = x2[0:cout - cmid, :].astype(o_ref.dtype)


def ghost_module_forward(x_nchw, params, out_channels, ratio=2, dw_size=3):
    eps = 1e-5
    # Fold BN into per-channel affine (eval mode).
    s1 = params["gamma1"] / jnp.sqrt(params["var1"] + eps)
    b1 = params["beta1"] - params["mean1"] * s1
    s2 = params["gamma2"] / jnp.sqrt(params["var2"] + eps)
    b2 = params["beta2"] - params["mean2"] * s2

    N, cin, H, W = x_nchw.shape
    cmid = params["w1"].shape[0]
    cnew = params["w2"].shape[0]
    mult = ratio - 1
    assert cnew == cmid * mult, (cnew, cmid, mult)
    K = dw_size
    HW = H * W
    f32 = jnp.float32

    w1 = params["w1"].reshape(cmid, cin).astype(f32)                 # (Cmid, Cin)
    w2 = params["w2"].reshape(cnew, K * K).astype(f32)               # (Cnew, K*K)
    s1c, b1c = s1.reshape(cmid, 1).astype(f32), b1.reshape(cmid, 1).astype(f32)
    s2c, b2c = s2.reshape(cnew, 1).astype(f32), b2.reshape(cnew, 1).astype(f32)

    # Grouped-conv channel multiplier handled by expanding the tiny 1x1 params
    # (never the activation): cheap-op output channel o reads x1[o // mult].
    if mult == 1:
        w1e, s1e, b1e = w1, s1c, b1c
    else:
        w1e = jnp.repeat(w1, mult, axis=0)
        s1e = jnp.repeat(s1c, mult, axis=0)
        b1e = jnp.repeat(b1c, mult, axis=0)

    # Per-tap boundary masks over the flattened spatial axis (parameter-sized constant).
    pos = jnp.arange(HW, dtype=jnp.int32)
    rr, cc = pos // W, pos % W
    pad = K // 2
    rows = []
    for di in range(-pad, pad + 1):
        for dj in range(-pad, pad + 1):
            ok = (rr + di >= 0) & (rr + di < H) & (cc + dj >= 0) & (cc + dj < W)
            rows.append(ok.astype(f32))
    tap_mask = jnp.stack(rows, axis=0)                               # (K*K, HW)

    x_flat = x_nchw.reshape(N, cin, HW)                              # free reshape, stays NCHW

    kernel = functools.partial(_ghost_kernel, H=H, W=W, cmid=cmid, cnew=cnew,
                               cout=out_channels, mult=mult, K=K)
    rep2 = lambda n: (0, 0)
    out = pl.pallas_call(
        kernel,
        out_shape=jax.ShapeDtypeStruct((N, out_channels, HW), x_nchw.dtype),
        grid=(N,),
        in_specs=[
            pl.BlockSpec((None, cin, HW), lambda n: (n, 0, 0)),
            pl.BlockSpec((cmid, cin), rep2),
            pl.BlockSpec((cmid, 1), rep2),
            pl.BlockSpec((cmid, 1), rep2),
            pl.BlockSpec((cnew, cin), rep2),
            pl.BlockSpec((cnew, 1), rep2),
            pl.BlockSpec((cnew, 1), rep2),
            pl.BlockSpec((cnew, K * K), rep2),
            pl.BlockSpec((cnew, 1), rep2),
            pl.BlockSpec((cnew, 1), rep2),
            pl.BlockSpec((K * K, HW), rep2),
        ],
        out_specs=pl.BlockSpec((None, out_channels, HW), lambda n: (n, 0, 0)),
        compiler_params=pltpu.CompilerParams(
            dimension_semantics=("parallel",)),
    )(x_flat, w1, s1c, b1c, w1e, s1e, b1e, w2, s2c, b2c, tap_mask)
    return out.reshape(N, out_channels, H, W)


# ----------------------------------------------------------------------------
# Pure-JAX reference (lax convs) for correctness checks
# ----------------------------------------------------------------------------
def ghost_module_reference(x_nchw, params, out_channels, ratio=2, dw_size=3):
    eps = 1e-5
    cmid = params["w1"].shape[0]
    dn = ("NCHW", "OIHW", "NCHW")
    y1 = jax.lax.conv_general_dilated(x_nchw, params["w1"], (1, 1),
                                      [(0, 0), (0, 0)], dimension_numbers=dn)
    s1 = params["gamma1"] / jnp.sqrt(params["var1"] + eps)
    b1 = params["beta1"] - params["mean1"] * s1
    x1 = jnp.maximum(y1 * s1[None, :, None, None] + b1[None, :, None, None], 0.0)

    p = dw_size // 2
    y2 = jax.lax.conv_general_dilated(x1, params["w2"], (1, 1),
                                      [(p, p), (p, p)], dimension_numbers=dn,
                                      feature_group_count=cmid)
    s2 = params["gamma2"] / jnp.sqrt(params["var2"] + eps)
    b2 = params["beta2"] - params["mean2"] * s2
    x2 = jnp.maximum(y2 * s2[None, :, None, None] + b2[None, :, None, None], 0.0)

    out = jnp.concatenate([x1, x2], axis=1)
    return out[:, :out_channels, :, :]


if __name__ == "__main__":
    def make_params(key, cin, out_channels, ratio, dw_size):
        inter = math.ceil(out_channels / ratio)
        new_ch = inter * (ratio - 1)
        ks = jax.random.split(key, 10)
        return {
            "w1":     jax.random.normal(ks[0], (inter, cin, 1, 1), jnp.float32) * 0.2,
            "gamma1": 1.0 + 0.1 * jax.random.normal(ks[1], (inter,), jnp.float32),
            "beta1":  0.1 * jax.random.normal(ks[2], (inter,), jnp.float32),
            "mean1":  0.1 * jax.random.normal(ks[3], (inter,), jnp.float32),
            "var1":   jax.random.uniform(ks[4], (inter,), jnp.float32, 0.5, 1.5),
            "w2":     jax.random.normal(ks[5], (new_ch, 1, dw_size, dw_size), jnp.float32) * 0.2,
            "gamma2": 1.0 + 0.1 * jax.random.normal(ks[6], (new_ch,), jnp.float32),
            "beta2":  0.1 * jax.random.normal(ks[7], (new_ch,), jnp.float32),
            "mean2":  0.1 * jax.random.normal(ks[8], (new_ch,), jnp.float32),
            "var2":   jax.random.uniform(ks[9], (new_ch,), jnp.float32, 0.5, 1.5),
        }

    key = jax.random.PRNGKey(0)
    kp1, kp2, kx1, kx2 = jax.random.split(key, 4)

    # Case 1: GhostModule(4, 8, ratio=2, dw_size=3) on (2, 4, 16, 16).
    p1 = make_params(kp1, 4, 8, 2, 3)
    xa = jax.random.normal(kx1, (2, 4, 16, 16), jnp.float32)
    out1 = jax.block_until_ready(ghost_module_forward(xa, p1, 8, ratio=2, dw_size=3))
    ref1 = ghost_module_reference(xa, p1, 8, ratio=2, dw_size=3)
    assert out1.shape == (2, 8, 16, 16), out1.shape
    assert jnp.allclose(out1, ref1, atol=1e-4, rtol=1e-4), float(jnp.max(jnp.abs(out1 - ref1)))

    # Case 2: ratio=3 (channel multiplier 2), non-square spatial, active channel slice.
    p2 = make_params(kp2, 3, 5, 3, 3)
    xb = jax.random.normal(kx2, (1, 3, 8, 12), jnp.float32)
    out2 = jax.block_until_ready(ghost_module_forward(xb, p2, 5, ratio=3, dw_size=3))
    ref2 = ghost_module_reference(xb, p2, 5, ratio=3, dw_size=3)
    assert out2.shape == (1, 5, 8, 12), out2.shape
    assert jnp.allclose(out2, ref2, atol=1e-4, rtol=1e-4), float(jnp.max(jnp.abs(out2 - ref2)))

    print("KERNEL_OK")
</pallas_src>

<mosaic_0001>
module attributes {stable_mosaic.version = 11 : i64} {
  func.func @_ghost_kernel(%arg0: i32, %arg1: memref<1x4x256xf32, #tpu.memory_space<vmem>>, %arg2: memref<4x4xf32, #tpu.memory_space<vmem>>, %arg3: memref<4x1xf32, #tpu.memory_space<vmem>>, %arg4: memref<4x1xf32, #tpu.memory_space<vmem>>, %arg5: memref<4x4xf32, #tpu.memory_space<vmem>>, %arg6: memref<4x1xf32, #tpu.memory_space<vmem>>, %arg7: memref<4x1xf32, #tpu.memory_space<vmem>>, %arg8: memref<4x9xf32, #tpu.memory_space<vmem>>, %arg9: memref<4x1xf32, #tpu.memory_space<vmem>>, %arg10: memref<4x1xf32, #tpu.memory_space<vmem>>, %arg11: memref<9x256xf32, #tpu.memory_space<vmem>>, %arg12: memref<1x8x256xf32, #tpu.memory_space<vmem>>) attributes {dimension_semantics = [#tpu.dimension_semantics<parallel>], iteration_bounds = array<i64: 2>, scalar_prefetch = 0 : i64, scratch_operands = 0 : i64, tpu.core_type = #tpu.core_type<tc>, window_params = [{transform_indices = @transform_0, window_bounds = array<i64: 1, 4, 256>}, {pipeline_mode = #tpu.pipeline_mode<synchronous>, transform_indices = @transform_1, window_bounds = array<i64: 4, 4>}, {pipeline_mode = #tpu.pipeline_mode<synchronous>, transform_indices = @transform_2, window_bounds = array<i64: 4, 1>}, {pipeline_mode = #tpu.pipeline_mode<synchronous>, transform_indices = @transform_3, window_bounds = array<i64: 4, 1>}, {pipeline_mode = #tpu.pipeline_mode<synchronous>, transform_indices = @transform_4, window_bounds = array<i64: 4, 4>}, {pipeline_mode = #tpu.pipeline_mode<synchronous>, transform_indices = @transform_5, window_bounds = array<i64: 4, 1>}, {pipeline_mode = #tpu.pipeline_mode<synchronous>, transform_indices = @transform_6, window_bounds = array<i64: 4, 1>}, {pipeline_mode = #tpu.pipeline_mode<synchronous>, transform_indices = @transform_7, window_bounds = array<i64: 4, 9>}, {pipeline_mode = #tpu.pipeline_mode<synchronous>, transform_indices = @transform_8, window_bounds = array<i64: 4, 1>}, {pipeline_mode = #tpu.pipeline_mode<synchronous>, transform_indices = @transform_9, window_bounds = array<i64: 4, 1>}, {pipeline_mode = #tpu.pipeline_mode<synchronous>, transform_indices = @transform_10, window_bounds = array<i64: 9, 256>}, {transform_indices = @transform_11, window_bounds = array<i64: 1, 8, 256>}]} {
    %c0 = arith.constant 0 : index
    %c0_0 = arith.constant 0 : index
    %c0_1 = arith.constant 0 : index
    %0 = vector.load %arg1[%c0, %c0_0, %c0_1] : memref<1x4x256xf32, #tpu.memory_space<vmem>>, vector<1x4x256xf32>
    %1 = vector.shape_cast %0 : vector<1x4x256xf32> to vector<4x256xf32>
    %c0_2 = arith.constant 0 : index
    %c0_3 = arith.constant 0 : index
    %2 = vector.load %arg5[%c0_2, %c0_3] : memref<4x4xf32, #tpu.memory_space<vmem>>, vector<4x4xf32>
    %cst = arith.constant 0.000000e+00 : f32
    %3 = vector.broadcast %cst : f32 to vector<4x256xf32>
    %4 = vector.extract_strided_slice %2 {offsets = [0, 0], sizes = [4, 1], strides = [1, 1]} : vector<4x4xf32> to vector<4x1xf32>
    %5 = vector.extract_strided_slice %1 {offsets = [0, 0], sizes = [1, 256], strides = [1, 1]} : vector<4x256xf32> to vector<1x256xf32>
    %6 = vector.broadcast %4 : vector<4x1xf32> to vector<4x256xf32>
    %7 = vector.broadcast %5 : vector<1x256xf32> to vector<4x256xf32>
    %8 = arith.mulf %6, %7 : vector<4x256xf32>
    %9 = arith.addf %3, %8 : vector<4x256xf32>
    %10 = vector.extract_strided_slice %2 {offsets = [0, 1], sizes = [4, 1], strides = [1, 1]} : vector<4x4xf32> to vector<4x1xf32>
    %11 = vector.extract_strided_slice %1 {offsets = [1, 0], sizes = [1, 256], strides = [1, 1]} : vector<4x256xf32> to vector<1x256xf32>
    %12 = vector.broadcast %10 : vector<4x1xf32> to vector<4x256xf32>
    %13 = vector.broadcast %11 : vector<1x256xf32> to vector<4x256xf32>
    %14 = arith.mulf %12, %13 : vector<4x256xf32>
    %15 = arith.addf %9, %14 : vector<4x256xf32>
    %16 = vector.extract_strided_slice %2 {offsets = [0, 2], sizes = [4, 1], strides = [1, 1]} : vector<4x4xf32> to vector<4x1xf32>
    %17 = vector.extract_strided_slice %1 {offsets = [2, 0], sizes = [1, 256], strides = [1, 1]} : vector<4x256xf32> to vector<1x256xf32>
    %18 = vector.broadcast %16 : vector<4x1xf32> to vector<4x256xf32>
    %19 = vector.broadcast %17 : vector<1x256xf32> to vector<4x256xf32>
    %20 = arith.mulf %18, %19 : vector<4x256xf32>
    %21 = arith.addf %15, %20 : vector<4x256xf32>
    %22 = vector.extract_strided_slice %2 {offsets = [0, 3], sizes = [4, 1], strides = [1, 1]} : vector<4x4xf32> to vector<4x1xf32>
    %23 = vector.extract_strided_slice %1 {offsets = [3, 0], sizes = [1, 256], strides = [1, 1]} : vector<4x256xf32> to vector<1x256xf32>
    %24 = vector.broadcast %22 : vector<4x1xf32> to vector<4x256xf32>
    %25 = vector.broadcast %23 : vector<1x256xf32> to vector<4x256xf32>
    %26 = arith.mulf %24, %25 : vector<4x256xf32>
    %27 = arith.addf %21, %26 : vector<4x256xf32>
    %c0_4 = arith.constant 0 : index
    %c0_5 = arith.constant 0 : index
    %28 = vector.load %arg6[%c0_4, %c0_5] : memref<4x1xf32, #tpu.memory_space<vmem>>, vector<4x1xf32>
    %29 = vector.broadcast %28 : vector<4x1xf32> to vector<4x256xf32>
    %30 = arith.mulf %27, %29 : vector<4x256xf32>
    %c0_6 = arith.constant 0 : index
    %c0_7 = arith.constant 0 : index
    %31 = vector.load %arg7[%c0_6, %c0_7] : memref<4x1xf32, #tpu.memory_space<vmem>>, vector<4x1xf32>
    %32 = vector.broadcast %31 : vector<4x1xf32> to vector<4x256xf32>
    %33 = arith.addf %30, %32 : vector<4x256xf32>
    %cst_8 = arith.constant 0.000000e+00 : f32
    %34 = vector.broadcast %cst_8 : f32 to vector<4x256xf32>
    %35 = arith.maximumf %33, %34 : vector<4x256xf32>
    %c0_9 = arith.constant 0 : index
    %c0_10 = arith.constant 0 : index
    %36 = vector.load %arg8[%c0_9, %c0_10] : memref<4x9xf32, #tpu.memory_space<vmem>>, vector<4x9xf32>
    %c0_11 = arith.constant 0 : index
    %c0_12 = arith.constant 0 : index
    %37 = vector.load %arg11[%c0_11, %c0_12] : memref<9x256xf32, #tpu.memory_space<vmem>>, vector<9x256xf32>
    %cst_13 = arith.constant 0.000000e+00 : f32
    %38 = vector.broadcast %cst_13 : f32 to vector<4x256xf32>
    %39 = vector.extract_strided_slice %35 {offsets = [0, 239], sizes = [4, 17], strides = [1, 1]} : vector<4x256xf32> to vector<4x17xf32>
    %40 = vector.extract_strided_slice %35 {offsets = [0, 0], sizes = [4, 239], strides = [1, 1]} : vector<4x256xf32> to vector<4x239xf32>
    %41 = tpu.concatenate %39, %40 in 1 : vector<4x17xf32>, vector<4x239xf32> -> vector<4x256xf32>
    %42 = vector.extract_strided_slice %37 {offsets = [0, 0], sizes = [1, 256], strides = [1, 1]} : vector<9x256xf32> to vector<1x256xf32>
    %43 = vector.broadcast %42 : vector<1x256xf32> to vector<4x256xf32>
    %44 = arith.mulf %41, %43 : vector<4x256xf32>
    %45 = vector.extract_strided_slice %36 {offsets = [0, 0], sizes = [4, 1], strides = [1, 1]} : vector<4x9xf32> to vector<4x1xf32>
    %46 = vector.broadcast %45 : vector<4x1xf32> to vector<4x256xf32>
    %47 = arith.mulf %46, %44 : vector<4x256xf32>
    %48 = arith.addf %38, %47 : vector<4x256xf32>
    %49 = vector.extract_strided_slice %35 {offsets = [0, 240], sizes = [4, 16], strides = [1, 1]} : vector<4x256xf32> to vector<4x16xf32>
    %50 = vector.extract_strided_slice %35 {offsets = [0, 0], sizes = [4, 240], strides = [1, 1]} : vector<4x256xf32> to vector<4x240xf32>
    %51 = tpu.concatenate %49, %50 in 1 : vector<4x16xf32>, vector<4x240xf32> -> vector<4x256xf32>
    %52 = vector.extract_strided_slice %37 {offsets = [1, 0], sizes = [1, 256], strides = [1, 1]} : vector<9x256xf32> to vector<1x256xf32>
    %53 = vector.broadcast %52 : vector<1x256xf32> to vector<4x256xf32>
    %54 = arith.mulf %51, %53 : vector<4x256xf32>
    %55 = vector.extract_strided_slice %36 {offsets = [0, 1], sizes = [4, 1], strides = [1, 1]} : vector<4x9xf32> to vector<4x1xf32>
    %56 = vector.broadcast %55 : vector<4x1xf32> to vector<4x256xf32>
    %57 = arith.mulf %56, %54 : vector<4x256xf32>
    %58 = arith.addf %48, %57 : vector<4x256xf32>
    %59 = vector.extract_strided_slice %35 {offsets = [0, 241], sizes = [4, 15], strides = [1, 1]} : vector<4x256xf32> to vector<4x15xf32>
    %60 = vector.extract_strided_slice %35 {offsets = [0, 0], sizes = [4, 241], strides = [1, 1]} : vector<4x256xf32> to vector<4x241xf32>
    %61 = tpu.concatenate %59, %60 in 1 : vector<4x15xf32>, vector<4x241xf32> -> vector<4x256xf32>
    %62 = vector.extract_strided_slice %37 {offsets = [2, 0], sizes = [1, 256], strides = [1, 1]} : vector<9x256xf32> to vector<1x256xf32>
    %63 = vector.broadcast %62 : vector<1x256xf32> to vector<4x256xf32>
    %64 = arith.mulf %61, %63 : vector<4x256xf32>
    %65 = vector.extract_strided_slice %36 {offsets = [0, 2], sizes = [4, 1], strides = [1, 1]} : vector<4x9xf32> to vector<4x1xf32>
    %66 = vector.broadcast %65 : vector<4x1xf32> to vector<4x256xf32>
    %67 = arith.mulf %66, %64 : vector<4x256xf32>
    %68 = arith.addf %58, %67 : vector<4x256xf32>
    %69 = vector.extract_strided_slice %35 {offsets = [0, 255], sizes = [4, 1], strides = [1, 1]} : vector<4x256xf32> to vector<4x1xf32>
    %70 = vector.extract_strided_slice %35 {offsets = [0, 0], sizes = [4, 255], strides = [1, 1]} : vector<4x256xf32> to vector<4x255xf32>
    %71 = tpu.concatenate %69, %70 in 1 : vector<4x1xf32>, vector<4x255xf32> -> vector<4x256xf32>
    %72 = vector.extract_strided_slice %37 {offsets = [3, 0], sizes = [1, 256], strides = [1, 1]} : vector<9x256xf32> to vector<1x256xf32>
    %73 = vector.broadcast %72 : vector<1x256xf32> to vector<4x256xf32>
    %74 = arith.mulf %71, %73 : vector<4x256xf32>
    %75 = vector.extract_strided_slice %36 {offsets = [0, 3], sizes = [4, 1], strides = [1, 1]} : vector<4x9xf32> to vector<4x1xf32>
    %76 = vector.broadcast %75 : vector<4x1xf32> to vector<4x256xf32>
    %77 = arith.mulf %76, %74 : vector<4x256xf32>
    %78 = arith.addf %68, %77 : vector<4x256xf32>
    %79 = vector.extract_strided_slice %37 {offsets = [4, 0], sizes = [1, 256], strides = [1, 1]} : vector<9x256xf32> to vector<1x256xf32>
    %80 = vector.broadcast %79 : vector<1x256xf32> to vector<4x256xf32>
    %81 = arith.mulf %35, %80 : vector<4x256xf32>
    %82 = vector.extract_strided_slice %36 {offsets = [0, 4], sizes = [4, 1], strides = [1, 1]} : vector<4x9xf32> to vector<4x1xf32>
    %83 = vector.broadcast %82 : vector<4x1xf32> to vector<4x256xf32>
    %84 = arith.mulf %83, %81 : vector<4x256xf32>
    %85 = arith.addf %78, %84 : vector<4x256xf32>
    %86 = vector.extract_strided_slice %35 {offsets = [0, 1], sizes = [4, 255], strides = [1, 1]} : vector<4x256xf32> to vector<4x255xf32>
    %87 = vector.extract_strided_slice %35 {offsets = [0, 0], sizes = [4, 1], strides = [1, 1]} : vector<4x256xf32> to vector<4x1xf32>
    %88 = tpu.concatenate %86, %87 in 1 : vector<4x255xf32>, vector<4x1xf32> -> vector<4x256xf32>
    %89 = vector.extract_strided_slice %37 {offsets = [5, 0], sizes = [1, 256], strides = [1, 1]} : vector<9x256xf32> to vector<1x256xf32>
    %90 = vector.broadcast %89 : vector<1x256xf32> to vector<4x256xf32>
    %91 = arith.mulf %88, %90 : vector<4x256xf32>
    %92 = vector.extract_strided_slice %36 {offsets = [0, 5], sizes = [4, 1], strides = [1, 1]} : vector<4x9xf32> to vector<4x1xf32>
    %93 = vector.broadcast %92 : vector<4x1xf32> to vector<4x256xf32>
    %94 = arith.mulf %93, %91 : vector<4x256xf32>
    %95 = arith.addf %85, %94 : vector<4x256xf32>
    %96 = vector.extract_strided_slice %35 {offsets = [0, 15], sizes = [4, 241], strides = [1, 1]} : vector<4x256xf32> to vector<4x241xf32>
    %97 = vector.extract_strided_slice %35 {offsets = [0, 0], sizes = [4, 15], strides = [1, 1]} : vector<4x256xf32> to vector<4x15xf32>
    %98 = tpu.concatenate %96, %97 in 1 : vector<4x241xf32>, vector<4x15xf32> -> vector<4x256xf32>
    %99 = vector.extract_strided_slice %37 {offsets = [6, 0], sizes = [1, 256], strides = [1, 1]} : vector<9x256xf32> to vector<1x256xf32>
    %100 = vector.broadcast %99 : vector<1x256xf32> to vector<4x256xf32>
    %101 = arith.mulf %98, %100 : vector<4x256xf32>
    %102 = vector.extract_strided_slice %36 {offsets = [0, 6], sizes = [4, 1], strides = [1, 1]} : vector<4x9xf32> to vector<4x1xf32>
    %103 = vector.broadcast %102 : vector<4x1xf32> to vector<4x256xf32>
    %104 = arith.mulf %103, %101 : vector<4x256xf32>
    %105 = arith.addf %95, %104 : vector<4x256xf32>
    %106 = vector.extract_strided_slice %35 {offsets = [0, 16], sizes = [4, 240], strides = [1, 1]} : vector<4x256xf32> to vector<4x240xf32>
    %107 = vector.extract_strided_slice %35 {offsets = [0, 0], sizes = [4, 16], strides = [1, 1]} : vector<4x256xf32> to vector<4x16xf32>
    %108 = tpu.concatenate %106, %107 in 1 : vector<4x240xf32>, vector<4x16xf32> -> vector<4x256xf32>
    %109 = vector.extract_strided_slice %37 {offsets = [7, 0], sizes = [1, 256], strides = [1, 1]} : vector<9x256xf32> to vector<1x256xf32>
    %110 = vector.broadcast %109 : vector<1x256xf32> to vector<4x256xf32>
    %111 = arith.mulf %108, %110 : vector<4x256xf32>
    %112 = vector.extract_strided_slice %36 {offsets = [0, 7], sizes = [4, 1], strides = [1, 1]} : vector<4x9xf32> to vector<4x1xf32>
    %113 = vector.broadcast %112 : vector<4x1xf32> to vector<4x256xf32>
    %114 = arith.mulf %113, %111 : vector<4x256xf32>
    %115 = arith.addf %105, %114 : vector<4x256xf32>
    %116 = vector.extract_strided_slice %35 {offsets = [0, 17], sizes = [4, 239], strides = [1, 1]} : vector<4x256xf32> to vector<4x239xf32>
    %117 = vector.extract_strided_slice %35 {offsets = [0, 0], sizes = [4, 17], strides = [1, 1]} : vector<4x256xf32> to vector<4x17xf32>
    %118 = tpu.concatenate %116, %117 in 1 : vector<4x239xf32>, vector<4x17xf32> -> vector<4x256xf32>
    %119 = vector.extract_strided_slice %37 {offsets = [8, 0], sizes = [1, 256], strides = [1, 1]} : vector<9x256xf32> to vector<1x256xf32>
    %120 = vector.broadcast %119 : vector<1x256xf32> to vector<4x256xf32>
    %121 = arith.mulf %118, %120 : vector<4x256xf32>
    %122 = vector.extract_strided_slice %36 {offsets = [0, 8], sizes = [4, 1], strides = [1, 1]} : vector<4x9xf32> to vector<4x1xf32>
    %123 = vector.broadcast %122 : vector<4x1xf32> to vector<4x256xf32>
    %124 = arith.mulf %123, %121 : vector<4x256xf32>
    %125 = arith.addf %115, %124 : vector<4x256xf32>
    %c0_14 = arith.constant 0 : index
    %c0_15 = arith.constant 0 : index
    %126 = vector.load %arg9[%c0_14, %c0_15] : memref<4x1xf32, #tpu.memory_space<vmem>>, vector<4x1xf32>
    %127 = vector.broadcast %126 : vector<4x1xf32> to vector<4x256xf32>
    %128 = arith.mulf %125, %127 : vector<4x256xf32>
    %c0_16 = arith.constant 0 : index
    %c0_17 = arith.constant 0 : index
    %129 = vector.load %arg10[%c0_16, %c0_17] : memref<4x1xf32, #tpu.memory_space<vmem>>, vector<4x1xf32>
    %130 = vector.broadcast %129 : vector<4x1xf32> to vector<4x256xf32>
    %131 = arith.addf %128, %130 : vector<4x256xf32>
    %cst_18 = arith.constant 0.000000e+00 : f32
    %132 = vector.broadcast %cst_18 : f32 to vector<4x256xf32>
    %133 = arith.maximumf %131, %132 : vector<4x256xf32>
    %c0_19 = arith.constant 0 : index
    %c0_20 = arith.constant 0 : index
    %c0_21 = arith.constant 0 : index
    %134 = vector.load %arg12[%c0_19, %c0_20, %c0_21] : memref<1x8x256xf32, #tpu.memory_space<vmem>>, vector<1x4x256xf32>
    %135 = vector.shape_cast %134 : vector<1x4x256xf32> to vector<4x256xf32>
    %136 = vector.shape_cast %35 : vector<4x256xf32> to vector<1x4x256xf32>
    tpu.vector_store %arg12[%c0_19, %c0_20, %c0_21], %136 {strides = array<i32>} : memref<1x8x256xf32, #tpu.memory_space<vmem>>, vector<1x4x256xf32>,
    %c0_22 = arith.constant 0 : index
    %c4 = arith.constant 4 : index
    %c0_23 = arith.constant 0 : index
    %137 = vector.load %arg12[%c0_22, %c4, %c0_23] : memref<1x8x256xf32, #tpu.memory_space<vmem>>, vector<1x4x256xf32>
    %138 = vector.shape_cast %137 : vector<1x4x256xf32> to vector<4x256xf32>
    %139 = vector.shape_cast %133 : vector<4x256xf32> to vector<1x4x256xf32>
    tpu.vector_store %arg12[%c0_22, %c4, %c0_23], %139 {strides = array<i32>} : memref<1x8x256xf32, #tpu.memory_space<vmem>>, vector<1x4x256xf32>,
    return
  }
  func.func @transform_0(%arg0: i32) -> (i32, i32, i32) {
    %c0_i32 = arith.constant 0 : i32
    %c0_i32_0 = arith.constant 0 : i32
    %c0_i32_1 = arith.constant 0 : i32
    return %arg0, %c0_i32, %c0_i32_0 : i32, i32, i32
  }
  func.func @transform_1(%arg0: i32) -> (i32, i32) {
    %c0_i32 = arith.constant 0 : i32
    %c0_i32_0 = arith.constant 0 : i32
    %c0_i32_1 = arith.constant 0 : i32
    return %c0_i32, %c0_i32_0 : i32, i32
  }
  func.func @transform_2(%arg0: i32) -> (i32, i32) {
    %c0_i32 = arith.constant 0 : i32
    %c0_i32_0 = arith.constant 0 : i32
    %c0_i32_1 = arith.constant 0 : i32
    return %c0_i32, %c0_i32_0 : i32, i32
  }
  func.func @transform_3(%arg0: i32) -> (i32, i32) {
    %c0_i32 = arith.constant 0 : i32
    %c0_i32_0 = arith.constant 0 : i32
    %c0_i32_1 = arith.constant 0 : i32
    return %c0_i32, %c0_i32_0 : i32, i32
  }
  func.func @transform_4(%arg0: i32) -> (i32, i32) {
    %c0_i32 = arith.constant 0 : i32
    %c0_i32_0 = arith.constant 0 : i32
    %c0_i32_1 = arith.constant 0 : i32
    return %c0_i32, %c0_i32_0 : i32, i32
  }
  func.func @transform_5(%arg0: i32) -> (i32, i32) {
    %c0_i32 = arith.constant 0 : i32
    %c0_i32_0 = arith.constant 0 : i32
    %c0_i32_1 = arith.constant 0 : i32
    return %c0_i32, %c0_i32_0 : i32, i32
  }
  func.func @transform_6(%arg0: i32) -> (i32, i32) {
    %c0_i32 = arith.constant 0 : i32
    %c0_i32_0 = arith.constant 0 : i32
    %c0_i32_1 = arith.constant 0 : i32
    return %c0_i32, %c0_i32_0 : i32, i32
  }
  func.func @transform_7(%arg0: i32) -> (i32, i32) {
    %c0_i32 = arith.constant 0 : i32
    %c0_i32_0 = arith.constant 0 : i32
    %c0_i32_1 = arith.constant 0 : i32
    return %c0_i32, %c0_i32_0 : i32, i32
  }
  func.func @transform_8(%arg0: i32) -> (i32, i32) {
    %c0_i32 = arith.constant 0 : i32
    %c0_i32_0 = arith.constant 0 : i32
    %c0_i32_1 = arith.constant 0 : i32
    return %c0_i32, %c0_i32_0 : i32, i32
  }
  func.func @transform_9(%arg0: i32) -> (i32, i32) {
    %c0_i32 = arith.constant 0 : i32
    %c0_i32_0 = arith.constant 0 : i32
    %c0_i32_1 = arith.constant 0 : i32
    return %c0_i32, %c0_i32_0 : i32, i32
  }
  func.func @transform_10(%arg0: i32) -> (i32, i32) {
    %c0_i32 = arith.constant 0 : i32
    %c0_i32_0 = arith.constant 0 : i32
    %c0_i32_1 = arith.constant 0 : i32
    return %c0_i32, %c0_i32_0 : i32, i32
  }
  func.func @transform_11(%arg0: i32) -> (i32, i32, i32) {
    %c0_i32 = arith.constant 0 : i32
    %c0_i32_0 = arith.constant 0 : i32
    %c0_i32_1 = arith.constant 0 : i32
    return %arg0, %c0_i32, %c0_i32_0 : i32, i32, i32
  }
}

</mosaic_0001>

<llo_original>
// kernel: tpu_custom_call.1
$region0: #{tpu_custom_call.1}
  #allocation0 [shape = 'u32[]', space=smem, size = 0x4, offset = 0x4, fixed_abs, tag = 'smem constant byte address 0x4 - core index']
  #allocation1 [shape = 'u32[144,128]{1,0:T(1,128)}', space=vmem, size = 0x12000, scoped, tag = 'internal scratch']
  %s0 = inlined_call_operand.vmem [shape: f32[2,4,256], index: 0, kind: input, shape index: {}]
  %s1 = inlined_call_operand.vmem [shape: f32[4,4], index: 1, kind: input, shape index: {}]
  %s2 = inlined_call_operand.vmem [shape: f32[4,1], index: 2, kind: input, shape index: {}]
  %s3 = inlined_call_operand.vmem [shape: f32[4,1], index: 3, kind: input, shape index: {}]
  %s4 = inlined_call_operand.vmem [shape: f32[4,4], index: 4, kind: input, shape index: {}]
  %s5 = inlined_call_operand.vmem [shape: f32[4,1], index: 5, kind: input, shape index: {}]
  %s6 = inlined_call_operand.vmem [shape: f32[4,1], index: 6, kind: input, shape index: {}]
  %s7 = inlined_call_operand.vmem [shape: f32[4,9], index: 7, kind: input, shape index: {}]
  %s8 = inlined_call_operand.vmem [shape: f32[4,1], index: 8, kind: input, shape index: {}]
  %s9 = inlined_call_operand.vmem [shape: f32[4,1], index: 9, kind: input, shape index: {}]
  %s10 = inlined_call_operand.vmem [shape: f32[9,256], index: 10, kind: input, shape index: {}]
  %s11 = inlined_call_operand.hbm [shape: f32[2,8,256], index: 11, kind: output, shape index: {}]
  %s12 = sld [smem:[#allocation0]]
  $region77: #{tpu_custom_call.1} parent=0
    _
  %s14 = ssub.s32 1, %s12
  %s15 = scalar_select 0, %s14, %s12
  $region1: #{tpu_custom_call.1} parent=0
    #allocation2 [shape = 'u8[16384]{0}', space=vmem, size = 0x4000, scoped, tag = 'output window, operand 0']
    #allocation3 [shape = 's32[2]{0}', space=sflag, size = 0x8, scoped, tag = 'scoped memory for tpu_custom_call.1']
    %16 = vsyncpa [#allocation3], 0
    %s17 = scalar_lea.sflag [#allocation3], 1
    %18 = vsyncpa %s17, 0
    loop: start=0, step=1, limit=4
    $region2: #{tpu_custom_call.1} parent=1 // loop_pre_header
      _
    $region3: #{tpu_custom_call.1} parent=1 // loop_header
      %s20 = sphi 0, %s24
      %p21 = scmp.ge.s32.totalorder %s20, 4
      %s30 = sphi 0, %s32
      %s33 = sphi 0, %s30
      %s34 = sphi 0, %s33
      %s50 = sphi 0, %s34
      %s54 = sphi 0, %s54
      %s56 = sphi 0, %s54
      %s57 = sphi 0, %s56
      %s71 = sphi 0, %s57
      %s75 = sphi 0, %s75
      %s77 = sphi 0, %s75
      %s78 = sphi 0, %s77
      %s92 = sphi 0, %s78
      %s96 = sphi 0, %s96
      %s98 = sphi 0, %s96
      %s99 = sphi 0, %s98
      %s113 = sphi 0, %s99
      %s117 = sphi 0, %s117
      %s119 = sphi 0, %s117
      %s120 = sphi 0, %s119
      %s134 = sphi 0, %s120
      %s138 = sphi 0, %s138
      %s140 = sphi 0, %s138
      %s141 = sphi 0, %s140
      %s155 = sphi 0, %s141
      %s159 = sphi 0, %s159
      %s161 = sphi 0, %s159
      %s162 = sphi 0, %s161
      %s176 = sphi 0, %s162
      %s180 = sphi 0, %s180
      %s182 = sphi 0, %s180
      %s183 = sphi 0, %s182
      %s197 = sphi 0, %s183
      %s201 = sphi 0, %s201
      %s203 = sphi 0, %s201
      %s204 = sphi 0, %s203
      %s218 = sphi 0, %s204
      %s222 = sphi 0, %s222
      %s224 = sphi 0, %s222
      %s225 = sphi 0, %s224
      %s239 = sphi 0, %s225
      %s243 = sphi 0, %s243
      %s245 = sphi 0, %s243
      %s246 = sphi 0, %s245
      %s260 = sphi 0, %s246
      %s266 = sphi 0, %s268
      %s269 = sphi 0, %s266
      %s270 = sphi 0, %s269
      %s286 = sphi 0, %s270
    $region4: #{tpu_custom_call.1} parent=1 // loop_header_branch
      %23 = sbr.rel (%p21) target = $region8
    $region5: #{tpu_custom_call.1} parent=1 // loop_body
      %s25 = ssub.s32 %s20, 1
      %s26 = ssub.s32 %s20, 2
      %s27 = sadd.s32 %s20, 1
      %s28 = ssub.s32 %s20, %s27
      %p29 = scmp.eq.s32.totalorder %s28, 0
      %s31 = sadd.s32 %s30, 1
      %s32 = scalar_select %p29, %s30, %s31
      %p35 = pneg %p29
      %p36 = scmp.eq.s32.totalorder %s20, 1
      %p37 = por %p35, %p36
      %p38 = scmp.ne.s32.totalorder %s30, %s33
      %p39 = scmp.eq.s32.totalorder %s20, 0
      %p40 = por %p38, %p39
      %p41 = scmp.ne.s32.totalorder %s30, %s33
      %p42 = scmp.eq.s32.totalorder %s25, 1
      %p43 = por %p41, %p42
      %p44 = scmp.ne.s32.totalorder %s33, %s34
      %p45 = scmp.eq.s32.totalorder %s25, 0
      %p46 = por %p44, %p45
      %p47 = scmp.ne.s32.totalorder %s33, %s34
      %p48 = scmp.eq.s32.totalorder %s26, 1
      %p49 = por %p47, %p48
      %p51 = scmp.ne.s32.totalorder %s34, %s50
      %p52 = scmp.eq.s32.totalorder %s26, 0
      %p53 = por %p51, %p52
      %s55 = sadd.s32 %s54, 1
      %p58 = scmp.eq.s32.totalorder %s20, 1
      %p59 = scmp.ne.s32.totalorder %s54, %s56
      %p60 = scmp.eq.s32.totalorder %s20, 0
      %p61 = por %p59, %p60
      %p62 = scmp.ne.s32.totalorder %s54, %s56
      %p63 = scmp.eq.s32.totalorder %s25, 1
      %p64 = por %p62, %p63
      %p65 = scmp.ne.s32.totalorder %s56, %s57
      %p66 = scmp.eq.s32.totalorder %s25, 0
      %p67 = por %p65, %p66
      %p68 = scmp.ne.s32.totalorder %s56, %s57
      %p69 = scmp.eq.s32.totalorder %s26, 1
      %p70 = por %p68, %p69
      %p72 = scmp.ne.s32.totalorder %s57, %s71
      %p73 = scmp.eq.s32.totalorder %s26, 0
      %p74 = por %p72, %p73
      %s76 = sadd.s32 %s75, 1
      %p79 = scmp.eq.s32.totalorder %s20, 1
      %p80 = scmp.ne.s32.totalorder %s75, %s77
      %p81 = scmp.eq.s32.totalorder %s20, 0
      %p82 = por %p80, %p81
      %p83 = scmp.ne.s32.totalorder %s75, %s77
      %p84 = scmp.eq.s32.totalorder %s25, 1
      %p85 = por %p83, %p84
      %p86 = scmp.ne.s32.totalorder %s77, %s78
      %p87 = scmp.eq.s32.totalorder %s25, 0
      %p88 = por %p86, %p87
      %p89 = scmp.ne.s32.totalorder %s77, %s78
      %p90 = scmp.eq.s32.totalorder %s26, 1
      %p91 = por %p89, %p90
      %p93 = scmp.ne.s32.totalorder %s78, %s92
      %p94 = scmp.eq.s32.totalorder %s26, 0
      %p95 = por %p93, %p94
      %s97 = sadd.s32 %s96, 1
      %p100 = scmp.eq.s32.totalorder %s20, 1
      %p101 = scmp.ne.s32.totalorder %s96, %s98
      %p102 = scmp.eq.s32.totalorder %s20, 0
      %p103 = por %p101, %p102
      %p104 = scmp.ne.s32.totalorder %s96, %s98
      %p105 = scmp.eq.s32.totalorder %s25, 1
      %p106 = por %p104, %p105
      %p107 = scmp.ne.s32.totalorder %s98, %s99
      %p108 = scmp.eq.s32.totalorder %s25, 0
      %p109 = por %p107, %p108
      %p110 = scmp.ne.s32.totalorder %s98, %s99
      %p111 = scmp.eq.s32.totalorder %s26, 1
      %p112 = por %p110, %p111
      %p114 = scmp.ne.s32.totalorder %s99, %s113
      %p115 = scmp.eq.s32.totalorder %s26, 0
      %p116 = por %p114, %p115
      %s118 = sadd.s32 %s117, 1
      %p121 = scmp.eq.s32.totalorder %s20, 1
      %p122 = scmp.ne.s32.totalorder %s117, %s119
      %p123 = scmp.eq.s32.totalorder %s20, 0
      %p124 = por %p122, %p123
      %p125 = scmp.ne.s32.totalorder %s117, %s119
      %p126 = scmp.eq.s32.totalorder %s25, 1
      %p127 = por %p125, %p126
      %p128 = scmp.ne.s32.totalorder %s119, %s120
      %p129 = scmp.eq.s32.totalorder %s25, 0
      %p130 = por %p128, %p129
      %p131 = scmp.ne.s32.totalorder %s119, %s120
      %p132 = scmp.eq.s32.totalorder %s26, 1
      %p133 = por %p131, %p132
      %p135 = scmp.ne.s32.totalorder %s120, %s134
      %p136 = scmp.eq.s32.totalorder %s26, 0
      %p137 = por %p135, %p136
      %s139 = sadd.s32 %s138, 1
      %p142 = scmp.eq.s32.totalorder %s20, 1
      %p143 = scmp.ne.s32.totalorder %s138, %s140
      %p144 = scmp.eq.s32.totalorder %s20, 0
      %p145 = por %p143, %p144
      %p146 = scmp.ne.s32.totalorder %s138, %s140
      %p147 = scmp.eq.s32.totalorder %s25, 1
      %p148 = por %p146, %p147
      %p149 = scmp.ne.s32.totalorder %s140, %s141
      %p150 = scmp.eq.s32.totalorder %s25, 0
      %p151 = por %p149, %p150
      %p152 = scmp.ne.s32.totalorder %s140, %s141
      %p153 = scmp.eq.s32.totalorder %s26, 1
      %p154 = por %p152, %p153
      %p156 = scmp.ne.s32.totalorder %s141, %s155
      %p157 = scmp.eq.s32.totalorder %s26, 0
      %p158 = por %p156, %p157
      %s160 = sadd.s32 %s159, 1
      %p163 = scmp.eq.s32.totalorder %s20, 1
      %p164 = scmp.ne.s32.totalorder %s159, %s161
      %p165 = scmp.eq.s32.totalorder %s20, 0
      %p166 = por %p164, %p165
      %p167 = scmp.ne.s32.totalorder %s159, %s161
      %p168 = scmp.eq.s32.totalorder %s25, 1
      %p169 = por %p167, %p168
      %p170 = scmp.ne.s32.totalorder %s161, %s162
      %p171 = scmp.eq.s32.totalorder %s25, 0
      %p172 = por %p170, %p171
      %p173 = scmp.ne.s32.totalorder %s161, %s162
      %p174 = scmp.eq.s32.totalorder %s26, 1
      %p175 = por %p173, %p174
      %p177 = scmp.ne.s32.totalorder %s162, %s176
      %p178 = scmp.eq.s32.totalorder %s26, 0
      %p179 = por %p177, %p178
      %s181 = sadd.s32 %s180, 1
      %p184 = scmp.eq.s32.totalorder %s20, 1
      %p185 = scmp.ne.s32.totalorder %s180, %s182
      %p186 = scmp.eq.s32.totalorder %s20, 0
      %p187 = por %p185, %p186
      %p188 = scmp.ne.s32.totalorder %s180, %s182
      %p189 = scmp.eq.s32.totalorder %s25, 1
      %p190 = por %p188, %p189
      %p191 = scmp.ne.s32.totalorder %s182, %s183
      %p192 = scmp.eq.s32.totalorder %s25, 0
      %p193 = por %p191, %p192
      %p194 = scmp.ne.s32.totalorder %s182, %s183
      %p195 = scmp.eq.s32.totalorder %s26, 1
      %p196 = por %p194, %p195
      %p198 = scmp.ne.s32.totalorder %s183, %s197
      %p199 = scmp.eq.s32.totalorder %s26, 0
      %p200 = por %p198, %p199
      %s202 = sadd.s32 %s201, 1
      %p205 = scmp.eq.s32.totalorder %s20, 1
      %p206 = scmp.ne.s32.totalorder %s201, %s203
      %p207 = scmp.eq.s32.totalorder %s20, 0
      %p208 = por %p206, %p207
      %p209 = scmp.ne.s32.totalorder %s201, %s203
      %p210 = scmp.eq.s32.totalorder %s25, 1
      %p211 = por %p209, %p210
      %p212 = scmp.ne.s32.totalorder %s203, %s204
      %p213 = scmp.eq.s32.totalorder %s25, 0
      %p214 = por %p212, %p213
      %p215 = scmp.ne.s32.totalorder %s203, %s204
      %p216 = scmp.eq.s32.totalorder %s26, 1
      %p217 = por %p215, %p216
      %p219 = scmp.ne.s32.totalorder %s204, %s218
      %p220 = scmp.eq.s32.totalorder %s26, 0
      %p221 = por %p219, %p220
      %s223 = sadd.s32 %s222, 1
      %p226 = scmp.eq.s32.totalorder %s20, 1
      %p227 = scmp.ne.s32.totalorder %s222, %s224
      %p228 = scmp.eq.s32.totalorder %s20, 0
      %p229 = por %p227, %p228
      %p230 = scmp.ne.s32.totalorder %s222, %s224
      %p231 = scmp.eq.s32.totalorder %s25, 1
      %p232 = por %p230, %p231
      %p233 = scmp.ne.s32.totalorder %s224, %s225
      %p234 = scmp.eq.s32.totalorder %s25, 0
      %p235 = por %p233, %p234
      %p236 = scmp.ne.s32.totalorder %s224, %s225
      %p237 = scmp.eq.s32.totalorder %s26, 1
      %p238 = por %p236, %p237
      %p240 = scmp.ne.s32.totalorder %s225, %s239
      %p241 = scmp.eq.s32.totalorder %s26, 0
      %p242 = por %p240, %p241
      %s244 = sadd.s32 %s243, 1
      %p247 = scmp.eq.s32.totalorder %s20, 1
      %p248 = scmp.ne.s32.totalorder %s243, %s245
      %p249 = scmp.eq.s32.totalorder %s20, 0
      %p250 = por %p248, %p249
      %p251 = scmp.ne.s32.totalorder %s243, %s245
      %p252 = scmp.eq.s32.totalorder %s25, 1
      %p253 = por %p251, %p252
      %p254 = scmp.ne.s32.totalorder %s245, %s246
      %p255 = scmp.eq.s32.totalorder %s25, 0
      %p256 = por %p254, %p255
      %p257 = scmp.ne.s32.totalorder %s245, %s246
      %p258 = scmp.eq.s32.totalorder %s26, 1
      %p259 = por %p257, %p258
      %p261 = scmp.ne.s32.totalorder %s246, %s260
      %p262 = scmp.eq.s32.totalorder %s26, 0
      %p263 = por %p261, %p262
      %s264 = ssub.s32 %s20, %s27
      %p265 = scmp.eq.s32.totalorder %s264, 0
      %s267 = sadd.s32 %s266, 1
      %s268 = scalar_select %p265, %s266, %s267
      %p271 = pneg %p265
      %p272 = scmp.eq.s32.totalorder %s20, 1
      %p273 = por %p271, %p272
      %p274 = scmp.ne.s32.totalorder %s266, %s269
      %p275 = scmp.eq.s32.totalorder %s20, 0
      %p276 = por %p274, %p275
      %p277 = scmp.ne.s32.totalorder %s266, %s269
      %p278 = scmp.eq.s32.totalorder %s25, 1
      %p279 = por %p277, %p278
      %p280 = scmp.ne.s32.totalorder %s269, %s270
      %p281 = scmp.eq.s32.totalorder %s25, 0
      %p282 = por %p280, %p281
      %p283 = scmp.ne.s32.totalorder %s269, %s270
      %p284 = scmp.eq.s32.totalorder %s26, 1
      %p285 = por %p283, %p284
      %p287 = scmp.ne.s32.totalorder %s270, %s286
      %p288 = scmp.eq.s32.totalorder %s26, 0
      %p289 = por %p287, %p288
      %p290 = scmp.le.s32.totalorder 1, %s20
      %p291 = scmp.lt.s32.totalorder %s20, 3
      %p292 = pnand %p290, %p291
      %p293 = pneg %p292
      // Predicated region
      $region9: #{tpu_custom_call.1} parent=5 // pred_check
        _
      $region10: #{tpu_custom_call.1} parent=5 // pred_check_branch
        %295 = sbr.rel (%p292) target = $region12
      $region11: #{tpu_custom_call.1} parent=5 // pred_region
        %s296 = ssub.s32 %s20, 1
        // Predicated region
        $region13: #{tpu_custom_call.1} parent=11 // pred_check
          %p297 = pneg %p67
        $region14: #{tpu_custom_call.1} parent=11 // pred_check_branch
          %299 = sbr.rel (%p297) target = $region16
        $region15: #{tpu_custom_call.1} parent=11 // pred_region
          _
        $region16: #{tpu_custom_call.1} parent=11 // pred_fallthru
          _
        // Predicated region
        $region17: #{tpu_custom_call.1} parent=11 // pred_check
          %p300 = pneg %p88
        $region18: #{tpu_custom_call.1} parent=11 // pred_check_branch
          %302 = sbr.rel (%p300) target = $region20
        $region19: #{tpu_custom_call.1} parent=11 // pred_region
          _
        $region20: #{tpu_custom_call.1} parent=11 // pred_fallthru
          _
        // Predicated region
        $region21: #{tpu_custom_call.1} parent=11 // pred_check
          %p303 = pneg %p109
        $region22: #{tpu_custom_call.1} parent=11 // pred_check_branch
          %305 = sbr.rel (%p303) target = $region24
        $region23: #{tpu_custom_call.1} parent=11 // pred_region
          _
        $region24: #{tpu_custom_call.1} parent=11 // pred_fallthru
          _
        // Predicated region
        $region25: #{tpu_custom_call.1} parent=11 // pred_check
          %p306 = pneg %p130
        $region26: #{tpu_custom_call.1} parent=11 // pred_check_branch
          %308 = sbr.rel (%p306) target = $region28
        $region27: #{tpu_custom_call.1} parent=11 // pred_region
          _
        $region28: #{tpu_custom_call.1} parent=11 // pred_fallthru
          _
        // Predicated region
        $region29: #{tpu_custom_call.1} parent=11 // pred_check
          %p309 = pneg %p151
        $region30: #{tpu_custom_call.1} parent=11 // pred_check_branch
          %311 = sbr.rel (%p309) target = $region32
        $region31: #{tpu_custom_call.1} parent=11 // pred_region
          _
        $region32: #{tpu_custom_call.1} parent=11 // pred_fallthru
          _
        // Predicated region
        $region33: #{tpu_custom_call.1} parent=11 // pred_check
          %p312 = pneg %p172
        $region34: #{tpu_custom_call.1} parent=11 // pred_check_branch
          %314 = sbr.rel (%p312) target = $region36
        $region35: #{tpu_custom_call.1} parent=11 // pred_region
          _
        $region36: #{tpu_custom_call.1} parent=11 // pred_fallthru
          _
        // Predicated region
        $region37: #{tpu_custom_call.1} parent=11 // pred_check
          %p315 = pneg %p193
        $region38: #{tpu_custom_call.1} parent=11 // pred_check_branch
          %317 = sbr.rel (%p315) target = $region40
        $region39: #{tpu_custom_call.1} parent=11 // pred_region
          _
        $region40: #{tpu_custom_call.1} parent=11 // pred_fallthru
          _
        // Predicated region
        $region41: #{tpu_custom_call.1} parent=11 // pred_check
          %p318 = pneg %p214
        $region42: #{tpu_custom_call.1} parent=11 // pred_check_branch
          %320 = sbr.rel (%p318) target = $region44
        $region43: #{tpu_custom_call.1} parent=11 // pred_region
          _
        $region44: #{tpu_custom_call.1} parent=11 // pred_fallthru
          _
        // Predicated region
        $region45: #{tpu_custom_call.1} parent=11 // pred_check
          %p321 = pneg %p235
        $region46: #{tpu_custom_call.1} parent=11 // pred_check_branch
          %323 = sbr.rel (%p321) target = $region48
        $region47: #{tpu_custom_call.1} parent=11 // pred_region
          _
        $region48: #{tpu_custom_call.1} parent=11 // pred_fallthru
          _
        // Predicated region
        $region49: #{tpu_custom_call.1} parent=11 // pred_check
          %p324 = pneg %p256
        $region50: #{tpu_custom_call.1} parent=11 // pred_check_branch
          %326 = sbr.rel (%p324) target = $region52
        $region51: #{tpu_custom_call.1} parent=11 // pred_region
          _
        $region52: #{tpu_custom_call.1} parent=11 // pred_fallthru
          _
      $region12: #{tpu_custom_call.1} parent=5 // pred_fallthru
        _
      %p327 = scmp.lt.s32.totalorder %s20, 2
      // Predicated region
      $region53: #{tpu_custom_call.1} parent=5 // pred_check
        %p328 = pneg %p327
      $region54: #{tpu_custom_call.1} parent=5 // pred_check_branch
        %330 = sbr.rel (%p328) target = $region56
      $region55: #{tpu_custom_call.1} parent=5 // pred_region
        // Predicated region
        $region57: #{tpu_custom_call.1} parent=55 // pred_check
          %p331 = pneg %p40
        $region58: #{tpu_custom_call.1} parent=55 // pred_check_branch
          %333 = sbr.rel (%p331) target = $region60
        $region59: #{tpu_custom_call.1} parent=55 // pred_region
          %p334 = scmp.lt.s32.totalorder %s20, 1
          %s335 = scalar_select %p334, %s20, 1
          %s336 = smul.addr %s335, 2
          %s337 = smul.addr %s336, 4
          %s338 = scalar_lea.vmem %s0, %s337
        $region60: #{tpu_custom_call.1} parent=55 // pred_fallthru
          _
      $region56: #{tpu_custom_call.1} parent=5 // pred_fallthru
        _
      %p339 = scmp.le.s32.totalorder 1, %s20
      %p340 = scmp.lt.s32.totalorder %s20, 3
      %p341 = pnand %p339, %p340
      %p342 = pneg %p341
      // Predicated region
      $region61: #{tpu_custom_call.1} parent=5 // pred_check
        _
      $region62: #{tpu_custom_call.1} parent=5 // pred_check_branch
        %344 = sbr.rel (%p341) target = $region64
      $region63: #{tpu_custom_call.1} parent=5 // pred_region
        %s345 = ssub.s32 %s20, 1
        %p346 = scmp.lt.s32.totalorder %s25, 1
        %s347 = scalar_select %p346, %s25, 1
        %s348 = smul.addr %s347, 2
        %s349 = smul.addr %s348, 4
        %s350 = scalar_lea.vmem %s0, %s349
        %p351 = pneg %p46
        %p352 = pneg %p43
        %p353 = pneg %p67
        %p354 = pneg %p64
        %p355 = pneg %p88
        %p356 = pneg %p85
        %p357 = pneg %p109
        %p358 = pneg %p106
        %p359 = pneg %p130
        %p360 = pneg %p127
        %p361 = pneg %p151
        %p362 = pneg %p148
        %p363 = pneg %p172
        %p364 = pneg %p169
        %p365 = pneg %p193
        %p366 = pneg %p190
        %p367 = pneg %p214
        %p368 = pneg %p211
        %p369 = pneg %p235
        %p370 = pneg %p232
        %p371 = pneg %p256
        %p372 = pneg %p253
        %p373 = pneg %p282
        %p374 = pneg %p279
        %s375 = sand.u32 %s269, 1
        %s376 = scalar_lea.sflag [#allocation3], %s375
        %s377 = sand.u32 %s269, 1
        %s378 = smul.addr %s377, 16
        %s379 = scalar_lea.vmem [#allocation2], %s378
        %p380 = scmp.lt.s32.totalorder %s25, 1
        %s381 = scalar_select %p380, %s25, 1
        %s382 = smul.addr %s381, 2
        %s383 = smul.addr %s382, 4
        %s384 = scalar_lea.vmem %s0, %s383
        %v385 = vld [vmem:[%s384] sm:$0xff]
        %v386 = vld [vmem:[%s4] sm:$0xf]
        %388 = vset.pattern.permute.xlu0 0
        %389 = vperm.xlu0 %388, %v386
        %v390 = vpop.permute.xlu0 %389
        %v393 = vlaneseq
        %v394 = vshrl.u32 %v393, 7
        %v395 = vsub.s32 0, %v394
        %v396 = vrot.slane %v385, %v395
        %v397 = vlaneseq
        %v398 = vshrl.u32 %v397, 7
        %v399 = vsub.s32 4, %v398
        %v400 = vrot.slane %v385, %v399
        %v403 = vlaneseq
        %v404 = vshrl.u32 %v403, 7
        %v405 = vsub.s32 0, %v404
        %v406 = vrot.slane %v396, %v405
        %v407 = vlaneseq
        %v408 = vshrl.u32 %v407, 7
        %v409 = vsub.s32 0, %v408
        %v410 = vrot.slane %v400, %v409
        %v411 = vmul.f32 %v390, %v406
        %v412 = vmul.f32 %v390, %v410
        %v413 = vadd.f32 %v411, 0.0
        %v414 = vadd.f32 %v412, 0.0
        %415 = vset.pattern.permute.xlu0 1
        %416 = vperm.xlu0 %415, %v386
        %v417 = vpop.permute.xlu0 %416
        %v419 = vlaneseq
        %v420 = vshrl.u32 %v419, 7
        %v421 = vsub.s32 1, %v420
        %v422 = vrot.slane %v385, %v421
        %v423 = vlaneseq
        %v424 = vshrl.u32 %v423, 7
        %v425 = vsub.s32 5, %v424
        %v426 = vrot.slane %v385, %v425
        %v429 = vlaneseq
        %v430 = vshrl.u32 %v429, 7
        %v431 = vsub.s32 1, %v430
        %v432 = vrot.slane %v422, %v431
        %v433 = vlaneseq
        %v434 = vshrl.u32 %v433, 7
        %v435 = vsub.s32 1, %v434
        %v436 = vrot.slane %v426, %v435
        %v437 = vmul.f32 %v417, %v432
        %v438 = vmul.f32 %v417, %v436
        %v439 = vadd.f32 %v413, %v437
        %v440 = vadd.f32 %v414, %v438
        %441 = vset.pattern.permute.xlu0 2
        %442 = vperm.xlu0 %441, %v386
        %v443 = vpop.permute.xlu0 %442
        %v445 = vlaneseq
        %v446 = vshrl.u32 %v445, 7
        %v447 = vsub.s32 2, %v446
        %v448 = vrot.slane %v385, %v447
        %v449 = vlaneseq
        %v450 = vshrl.u32 %v449, 7
        %v451 = vsub.s32 6, %v450
        %v452 = vrot.slane %v385, %v451
        %v455 = vlaneseq
        %v456 = vshrl.u32 %v455, 7
        %v457 = vsub.s32 2, %v456
        %v458 = vrot.slane %v448, %v457
        %v459 = vlaneseq
        %v460 = vshrl.u32 %v459, 7
        %v461 = vsub.s32 2, %v460
        %v462 = vrot.slane %v452, %v461
        %v463 = vmul.f32 %v443, %v458
        %v464 = vmul.f32 %v443, %v462
        %v465 = vadd.f32 %v439, %v463
        %v466 = vadd.f32 %v440, %v464
        %467 = vset.pattern.permute.xlu0 3
        %468 = vperm.xlu0 %467, %v386
        %v469 = vpop.permute.xlu0 %468
        %v471 = vlaneseq
        %v472 = vshrl.u32 %v471, 7
        %v473 = vsub.s32 3, %v472
        %v474 = vrot.slane %v385, %v473
        %v475 = vlaneseq
        %v476 = vshrl.u32 %v475, 7
        %v477 = vsub.s32 7, %v476
        %v478 = vrot.slane %v385, %v477
        %v481 = vlaneseq
        %v482 = vshrl.u32 %v481, 7
        %v483 = vsub.s32 3, %v482
        %v484 = vrot.slane %v474, %v483
        %v485 = vlaneseq
        %v486 = vshrl.u32 %v485, 7
        %v487 = vsub.s32 3, %v486
        %v488 = vrot.slane %v478, %v487
        %v489 = vmul.f32 %v469, %v484
        %v490 = vmul.f32 %v469, %v488
        %v491 = vadd.f32 %v465, %v489
        %v492 = vadd.f32 %v466, %v490
        %v493 = vld [vmem:[%s5] sm:$0xf]
        %495 = vset.pattern.permute.xlu0 0
        %496 = vperm.xlu0 %495, %v493
        %v497 = vpop.permute.xlu0 %496
        %v499 = vmul.f32 %v491, %v497
        %v500 = vmul.f32 %v492, %v497
        %v501 = vld [vmem:[%s6] sm:$0xf]
        %503 = vset.pattern.permute.xlu0 0
        %504 = vperm.xlu0 %503, %v501
        %v505 = vpop.permute.xlu0 %504
        %v507 = vadd.f32 %v499, %v505
        %v508 = vadd.f32 %v500, %v505
        %v509 = vmax.f32 %v507, 0.0
        %v510 = vmax.f32 %v508, 0.0
        %v511 = vld [vmem:[%s7] sm:$0xf]
        %v512 = vld [vmem:[%s10] sm:$0xff]
        %v513 = vld [vmem:[%s10 + $0x8] sm:$0xff]
        %v514 = vld [vmem:[%s10 + $0x10] sm:$0x1]
        %v515 = vld [vmem:[%s10 + $0x18] sm:$0x1]
        %517 = vrot.lane.b32.xlu0 %v510, 17
        %v518 = vpop.permute.xlu0 %517
        %521 = vrot.lane.b32.xlu0 %v509, 17
        %v522 = vpop.permute.xlu0 %521
        %vm523 = vcmask 138240
        %v524 = vsel %vm523, %v522, %v518
        %v527 = vsel %vm523, %v518, %v522
        %v528 = vlaneseq
        %v529 = vshrl.u32 %v528, 7
        %v530 = vsub.s32 0, %v529
        %v531 = vrot.slane %v512, %v530
        %v532 = vlaneseq
        %v533 = vshrl.u32 %v532, 7
        %v534 = vsub.s32 0, %v533
        %v535 = vrot.slane %v513, %v534
        %v536 = vmul.f32 %v527, %v531
        %v537 = vmul.f32 %v524, %v535
        %539 = vset.pattern.permute.xlu0 0
        %540 = vperm.xlu0 %539, %v511
        %v541 = vpop.permute.xlu0 %540
        %v543 = vmul.f32 %v541, %v536
        %v544 = vmul.f32 %v541, %v537
        %v545 = vadd.f32 %v543, 0.0
        %v546 = vadd.f32 %v544, 0.0
        %547 = vrot.lane.b32.xlu0 %v510, 16
        %v548 = vpop.permute.xlu0 %547
        %550 = vrot.lane.b32.xlu0 %v509, 16
        %v551 = vpop.permute.xlu0 %550
        %vm552 = vcmask 130048
        %v553 = vsel %vm552, %v551, %v548
        %v556 = vsel %vm552, %v548, %v551
        %v557 = vlaneseq
        %v558 = vshrl.u32 %v557, 7
        %v559 = vsub.s32 1, %v558
        %v560 = vrot.slane %v512, %v559
        %v561 = vlaneseq
        %v562 = vshrl.u32 %v561, 7
        %v563 = vsub.s32 1, %v562
        %v564 = vrot.slane %v513, %v563
        %v565 = vmul.f32 %v556, %v560
        %v566 = vmul.f32 %v553, %v564
        %567 = vset.pattern.permute.xlu0 1
        %568 = vperm.xlu0 %567, %v511
        %v569 = vpop.permute.xlu0 %568
        %v571 = vmul.f32 %v569, %v565
        %v572 = vmul.f32 %v569, %v566
        %v573 = vadd.f32 %v545, %v571
        %v574 = vadd.f32 %v546, %v572
        %575 = vrot.lane.b32.xlu0 %v510, 15
        %v576 = vpop.permute.xlu0 %575
        %578 = vrot.lane.b32.xlu0 %v509, 15
        %v579 = vpop.permute.xlu0 %578
        %vm580 = vcmask 121856
        %v581 = vsel %vm580, %v579, %v576
        %v584 = vsel %vm580, %v576, %v579
        %v585 = vlaneseq
        %v586 = vshrl.u32 %v585, 7
        %v587 = vsub.s32 2, %v586
        %v588 = vrot.slane %v512, %v587
        %v589 = vlaneseq
        %v590 = vshrl.u32 %v589, 7
        %v591 = vsub.s32 2, %v590
        %v592 = vrot.slane %v513, %v591
        %v593 = vmul.f32 %v584, %v588
        %v594 = vmul.f32 %v581, %v592
        %595 = vset.pattern.permute.xlu0 2
        %596 = vperm.xlu0 %595, %v511
        %v597 = vpop.permute.xlu0 %596
        %v599 = vmul.f32 %v597, %v593
        %v600 = vmul.f32 %v597, %v594
        %v601 = vadd.f32 %v573, %v599
        %v602 = vadd.f32 %v574, %v600
        %603 = vrot.lane.b32.xlu0 %v510, 1
        %v604 = vpop.permute.xlu0 %603
        %606 = vrot.lane.b32.xlu0 %v509, 1
        %v607 = vpop.permute.xlu0 %606
        %vm608 = vcmask 7168
        %v609 = vsel %vm608, %v607, %v604
        %v612 = vsel %vm608, %v604, %v607
        %v613 = vlaneseq
        %v614 = vshrl.u32 %v613, 7
        %v615 = vsub.s32 3, %v614
        %v616 = vrot.slane %v512, %v615
        %v617 = vlaneseq
        %v618 = vshrl.u32 %v617, 7
        %v619 = vsub.s32 3, %v618
        %v620 = vrot.slane %v513, %v619
        %v621 = vmul.f32 %v612, %v616
        %v622 = vmul.f32 %v609, %v620
        %623 = vset.pattern.permute.xlu0 3
        %624 = vperm.xlu0 %623, %v511
        %v625 = vpop.permute.xlu0 %624
        %v627 = vmul.f32 %v625, %v621
        %v628 = vmul.f32 %v625, %v622
        %v629 = vadd.f32 %v601, %v627
        %v630 = vadd.f32 %v602, %v628
        %v631 = vlaneseq
        %v632 = vshrl.u32 %v631, 7
        %v633 = vsub.s32 4, %v632
        %v634 = vrot.slane %v512, %v633
        %v635 = vlaneseq
        %v636 = vshrl.u32 %v635, 7
        %v637 = vsub.s32 4, %v636
        %v638 = vrot.slane %v513, %v637
        %v639 = vmul.f32 %v509, %v634
        %v640 = vmul.f32 %v510, %v638
        %641 = vset.pattern.permute.xlu0 4
        %642 = vperm.xlu0 %641, %v511
        %v643 = vpop.permute.xlu0 %642
        %v645 = vmul.f32 %v643, %v639
        %v646 = vmul.f32 %v643, %v640
        %v647 = vadd.f32 %v629, %v645
        %v648 = vadd.f32 %v630, %v646
        %649 = vrot.lane.b32.xlu0 %v509, 127
        %v650 = vpop.permute.xlu0 %649
        %651 = vrot.lane.b32.xlu0 %v510, 127
        %v652 = vpop.permute.xlu0 %651
        %vm653 = vcmask 1039360
        %v654 = vsel %vm653, %v650, %v652
        %v658 = vsel %vm653, %v652, %v650
        %v659 = vlaneseq
        %v660 = vshrl.u32 %v659, 7
        %v661 = vsub.s32 5, %v660
        %v662 = vrot.slane %v512, %v661
        %v663 = vlaneseq
        %v664 = vshrl.u32 %v663, 7
        %v665 = vsub.s32 5, %v664
        %v666 = vrot.slane %v513, %v665
        %v667 = vmul.f32 %v654, %v662
        %v668 = vmul.f32 %v658, %v666
        %669 = vset.pattern.permute.xlu0 5
        %670 = vperm.xlu0 %669, %v511
        %v671 = vpop.permute.xlu0 %670
        %v673 = vmul.f32 %v671, %v667
        %v674 = vmul.f32 %v671, %v668
        %v675 = vadd.f32 %v647, %v673
        %v676 = vadd.f32 %v648, %v674
        %677 = vrot.lane.b32.xlu0 %v509, 113
        %v678 = vpop.permute.xlu0 %677
        %679 = vrot.lane.b32.xlu0 %v510, 113
        %v680 = vpop.permute.xlu0 %679
        %vm681 = vcmask 924672
        %v682 = vsel %vm681, %v678, %v680
        %v686 = vsel %vm681, %v680, %v678
        %v687 = vlaneseq
        %v688 = vshrl.u32 %v687, 7
        %v689 = vsub.s32 6, %v688
        %v690 = vrot.slane %v512, %v689
        %v691 = vlaneseq
        %v692 = vshrl.u32 %v691, 7
        %v693 = vsub.s32 6, %v692
        %v694 = vrot.slane %v513, %v693
        %v695 = vmul.f32 %v682, %v690
        %v696 = vmul.f32 %v686, %v694
        %697 = vset.pattern.permute.xlu0 6
        %698 = vperm.xlu0 %697, %v511
        %v699 = vpop.permute.xlu0 %698
        %v701 = vmul.f32 %v699, %v695
        %v702 = vmul.f32 %v699, %v696
        %v703 = vadd.f32 %v675, %v701
        %v704 = vadd.f32 %v676, %v702
        %705 = vrot.lane.b32.xlu0 %v509, 112
        %v706 = vpop.permute.xlu0 %705
        %707 = vrot.lane.b32.xlu0 %v510, 112
        %v708 = vpop.permute.xlu0 %707
        %vm709 = vcmask 916480
        %v710 = vsel %vm709, %v706, %v708
        %v714 = vsel %vm709, %v708, %v706
        %v715 = vlaneseq
        %v716 = vshrl.u32 %v715, 7
        %v717 = vsub.s32 7, %v716
        %v718 = vrot.slane %v512, %v717
        %v719 = vlaneseq
        %v720 = vshrl.u32 %v719, 7
        %v721 = vsub.s32 7, %v720
        %v722 = vrot.slane %v513, %v721
        %v723 = vmul.f32 %v710, %v718
        %v724 = vmul.f32 %v714, %v722
        %725 = vset.pattern.permute.xlu0 7
        %726 = vperm.xlu0 %725, %v511
        %v727 = vpop.permute.xlu0 %726
        %v729 = vmul.f32 %v727, %v723
        %v730 = vmul.f32 %v727, %v724
        %v731 = vadd.f32 %v703, %v729
        %v732 = vadd.f32 %v704, %v730
        %733 = vrot.lane.b32.xlu0 %v509, 111
        %v734 = vpop.permute.xlu0 %733
        %735 = vrot.lane.b32.xlu0 %v510, 111
        %v736 = vpop.permute.xlu0 %735
        %vm737 = vcmask 908288
        %v738 = vsel %vm737, %v734, %v736
        %v742 = vsel %vm737, %v736, %v734
        %v743 = vlaneseq
        %v744 = vshrl.u32 %v743, 7
        %v745 = vsub.s32 0, %v744
        %v746 = vrot.slane %v514, %v745
        %v747 = vlaneseq
        %v748 = vshrl.u32 %v747, 7
        %v749 = vsub.s32 0, %v748
        %v750 = vrot.slane %v515, %v749
        %v751 = vmul.f32 %v738, %v746
        %v752 = vmul.f32 %v742, %v750
        %753 = vset.pattern.permute.xlu0 8
        %754 = vperm.xlu0 %753, %v511
        %v755 = vpop.permute.xlu0 %754
        %v757 = vmul.f32 %v755, %v751
        %v758 = vmul.f32 %v755, %v752
        %v759 = vadd.f32 %v731, %v757
        %v760 = vadd.f32 %v732, %v758
        %v761 = vld [vmem:[%s8] sm:$0xf]
        %763 = vset.pattern.permute.xlu0 0
        %764 = vperm.xlu0 %763, %v761
        %v765 = vpop.permute.xlu0 %764
        %v767 = vmul.f32 %v759, %v765
        %v768 = vmul.f32 %v760, %v765
        %v769 = vld [vmem:[%s9] sm:$0xf]
        %771 = vset.pattern.permute.xlu0 0
        %772 = vperm.xlu0 %771, %v769
        %v773 = vpop.permute.xlu0 %772
        %v775 = vadd.f32 %v767, %v773
        %v776 = vadd.f32 %v768, %v773
        %v777 = vmax.f32 %v775, 0.0
        %v778 = vmax.f32 %v776, 0.0
        %779 = vst [vmem:[%s379] sm:$0xf] %v509
        %780 = vst [vmem:[%s379 + $0x8] sm:$0xf] %v510
        %v783 = vrot.slane %v777, 4
        %v784 = vrot.slane %v778, 4
        %787 = vst [vmem:[%s379] sm:$0xf0] %v783
        %788 = vst [vmem:[%s379 + $0x8] sm:$0xf0] %v784
        %s789 = sand.u32 %s269, 1
        %s790 = scalar_lea.sflag [#allocation3], %s789
        %s791 = sand.u32 %s269, 1
        %s792 = smul.addr %s791, 16
        %s793 = scalar_lea.vmem [#allocation2], %s792
        // Predicated region
        $region65: #{tpu_custom_call.1} parent=63 // pred_check
          %p794 = pneg %p279
        $region66: #{tpu_custom_call.1} parent=63 // pred_check_branch
          %796 = sbr.rel (%p794) target = $region68
        $region67: #{tpu_custom_call.1} parent=63 // pred_region
          %s798 = ssub.s32 256, 256
          %799 = vsyncadd %s790, %s798
          %s800 = smul.addr %s25, 2
          %s801 = smul.addr %s800, 128
          %s802 = scalar_lea.hbm %s11, %s801
          %s804 = sshll.u32 %s793, 4
          %s805 = int_to_ptr.vmem [resolvable:$true] %s804
          %807 = dma.vmem_to_hbm [thread:$0]  %s805, 256, %s802, %s790
        $region68: #{tpu_custom_call.1} parent=63 // pred_fallthru
          _
      $region64: #{tpu_custom_call.1} parent=5 // pred_fallthru
        _
      %p808 = scmp.le.s32.totalorder 2, %s20
      // Predicated region
      $region69: #{tpu_custom_call.1} parent=5 // pred_check
        %p809 = pneg %p808
      $region70: #{tpu_custom_call.1} parent=5 // pred_check_branch
        %811 = sbr.rel (%p809) target = $region72
      $region71: #{tpu_custom_call.1} parent=5 // pred_region
        %s812 = ssub.s32 %s20, 2
        // Predicated region
        $region73: #{tpu_custom_call.1} parent=71 // pred_check
          %p813 = pneg %p285
        $region74: #{tpu_custom_call.1} parent=71 // pred_check_branch
          %815 = sbr.rel (%p813) target = $region76
        $region75: #{tpu_custom_call.1} parent=71 // pred_region
          %s816 = sand.u32 %s270, 1
          %s817 = scalar_lea.sflag [#allocation3], %s816
          %s818 = sand.u32 %s270, 1
          %s819 = smul.addr %s818, 16
          %s820 = scalar_lea.vmem [#allocation2], %s819
          %821 = dma.done %s817, 256
        $region76: #{tpu_custom_call.1} parent=71 // pred_fallthru
          _
      $region72: #{tpu_custom_call.1} parent=5 // pred_fallthru
        _
    $region6: #{tpu_custom_call.1} parent=1 // loop_footer
      %s24 = sadd.s32 1, %s20
    $region7: #{tpu_custom_call.1} parent=1 // loop_footer_branch
      %19 = sbr.rel target = $region3
    $region8: #{tpu_custom_call.1} parent=1 // loop_exit
      _
    %822 = vsyncpa [#allocation3], 1
    %s823 = scalar_lea.sflag [#allocation3], 1
    %824 = vsyncpa %s823, 1

</llo_original>
